<compile_context>
chip_gen: v7x
topology: tpu7x:2x2x1
jax: 0.10.0
libtpu: 0.0.40
codegen_flags: <defaults>
</compile_context>

<pallas_src>
import jax
import jax.numpy as jnp
from jax import lax
from jax.experimental import pallas as pl
from jax.experimental.pallas import tpu as pltpu

_INV_SQRT_2 = 0.7071067811865476


def adapter_eraser_kernel(x_ref, wd_ref, bd_ref, wu_ref, bu_ref, o_ref):
    # x_ref:  (TM, dim)   native dtype (bf16 fast path / f32 exact path)
    # wd_ref: (mid, dim)  PyTorch Linear layout -- contracted on its last axis
    # bd_ref: (1, mid)
    # wu_ref: (dim, mid)  PyTorch Linear layout
    # bu_ref: (1, dim)
    # o_ref:  (TM, dim)
    x = x_ref[...]

    # down projection: contract x feature axis with w_down feature axis (NT matmul).
    h = lax.dot_general(
        x, wd_ref[...],
        dimension_numbers=(((1,), (1,)), ((), ())),
        preferred_element_type=jnp.float32)
    h = h + bd_ref[...].astype(jnp.float32)

    # exact GELU (erf-based, matches PyTorch nn.GELU default).
    h = 0.5 * h * (1.0 + lax.erf(h * _INV_SQRT_2))

    # Feed the MXU its native input dtype again (no-op for f32 inputs).
    h = h.astype(x_ref.dtype)

    # up projection (zero-initialized by zero_module in the original module).
    out = lax.dot_general(
        h, wu_ref[...],
        dimension_numbers=(((1,), (1,)), ((), ())),
        preferred_element_type=jnp.float32)
    out = out + bu_ref[...].astype(jnp.float32)

    o_ref[...] = out.astype(o_ref.dtype)


def _round_up(x, m):
    return (x + m - 1) // m * m


def adapter_eraser(hidden_states, w_down, b_down, w_up, b_up, *, tm=512):
    """hidden_states: [..., dim]; w_down: (mid_dim, dim); w_up: (dim, mid_dim)."""
    orig_shape = hidden_states.shape
    dim = orig_shape[-1]
    mid_dim = w_down.shape[0]
    assert w_down.shape == (mid_dim, dim)
    assert w_up.shape == (dim, mid_dim)

    x2d = hidden_states.reshape(-1, dim)
    M = x2d.shape[0]

    # Lane-dense feature dims (static check -> no pad op for aligned prod shapes).
    dim_p = _round_up(dim, 128)
    mid_p = _round_up(mid_dim, 128)

    # Row tile: big for MXU occupancy, but don't over-pad tiny inputs.
    tm_eff = min(tm, _round_up(M, 8))
    M_p = _round_up(M, tm_eff)

    # Zero padding is inert: padded b_down entries are 0 -> gelu(0)=0, and
    # padded w_up rows/cols are 0, so padded output columns are exactly 0.
    if dim_p != dim or mid_p != mid_dim:
        wd = jnp.pad(w_down, ((0, mid_p - mid_dim), (0, dim_p - dim)))
        wu = jnp.pad(w_up, ((0, dim_p - dim), (0, mid_p - mid_dim)))
        bd = jnp.pad(b_down, (0, mid_p - mid_dim))
        bu = jnp.pad(b_up, (0, dim_p - dim))
    else:
        wd, wu, bd, bu = w_down, w_up, b_down, b_up
    if M_p != M or dim_p != dim:
        x2d = jnp.pad(x2d, ((0, M_p - M), (0, dim_p - dim)))

    bd2 = bd.reshape(1, mid_p)
    bu2 = bu.reshape(1, dim_p)

    grid = (M_p // tm_eff,)

    out2d = pl.pallas_call(
        adapter_eraser_kernel,
        out_shape=jax.ShapeDtypeStruct((M_p, dim_p), hidden_states.dtype),
        grid_spec=pltpu.PrefetchScalarGridSpec(
            num_scalar_prefetch=0,
            grid=grid,
            in_specs=[
                # activations: pipelined across the row grid
                pl.BlockSpec((tm_eff, dim_p), lambda i: (i, 0)),
                # weights / biases: grid-invariant -> single-buffered residents
                pl.BlockSpec((mid_p, dim_p), lambda i: (0, 0),
                             pipeline_mode=pl.Buffered(1)),
                pl.BlockSpec((1, mid_p), lambda i: (0, 0),
                             pipeline_mode=pl.Buffered(1)),
                pl.BlockSpec((dim_p, mid_p), lambda i: (0, 0),
                             pipeline_mode=pl.Buffered(1)),
                pl.BlockSpec((1, dim_p), lambda i: (0, 0),
                             pipeline_mode=pl.Buffered(1)),
            ],
            out_specs=pl.BlockSpec((tm_eff, dim_p), lambda i: (i, 0)),
        ),
        compiler_params=pltpu.CompilerParams(
            dimension_semantics=("parallel",),
            # Sized for v7x's 64 MiB physical VMEM; also raises the smaller
            # default scoped limits on v5e/v6e.
            vmem_limit_bytes=64 * 1024 * 1024,
        ),
    )(x2d, wd, bd2, wu, bu2)

    return out2d[:M, :dim].reshape(orig_shape)


def _reference(hidden_states, w_down, b_down, w_up, b_up):
    h = hidden_states.astype(jnp.float32) @ w_down.astype(jnp.float32).T
    h = h + b_down.astype(jnp.float32)
    h = 0.5 * h * (1.0 + lax.erf(h * _INV_SQRT_2))
    out = h @ w_up.astype(jnp.float32).T + b_up.astype(jnp.float32)
    return out.astype(hidden_states.dtype)


def init_params(key, dim, mid_dim, dtype=jnp.float32):
    # PyTorch nn.Linear default init for `down`: U(-1/sqrt(in), 1/sqrt(in)).
    k1, k2 = jax.random.split(key)
    bound = 1.0 / (dim ** 0.5)
    w_down = jax.random.uniform(k1, (mid_dim, dim), dtype, minval=-bound, maxval=bound)
    b_down = jax.random.uniform(k2, (mid_dim,), dtype, minval=-bound, maxval=bound)
    # zero_module(nn.Linear(mid_dim, dim)) -> all zeros.
    w_up = jnp.zeros((dim, mid_dim), dtype)
    b_up = jnp.zeros((dim,), dtype)
    return w_down, b_down, w_up, b_up


if __name__ == "__main__":
    key = jax.random.PRNGKey(0)
    batch, seq, dim, mid_dim = 2, 8, 32, 8

    kx, kp, kw, kb = jax.random.split(key, 4)
    hidden_states = jax.random.normal(kx, (batch, seq, dim), jnp.float32)
    w_down, b_down, w_up, b_up = init_params(kp, dim, mid_dim)

    # 1) Faithful module: zero-initialized up projection -> output is all zeros.
    out = adapter_eraser(hidden_states, w_down, b_down, w_up, b_up)
    out = jax.block_until_ready(out)
    ref = _reference(hidden_states, w_down, b_down, w_up, b_up)
    assert out.shape == hidden_states.shape
    assert jnp.allclose(out, ref, atol=1e-5), "mismatch vs reference (zero up)"

    # 2) Sanity check of the full math path with non-zero up weights.
    w_up_nz = 0.05 * jax.random.normal(kw, (dim, mid_dim), jnp.float32)
    b_up_nz = 0.05 * jax.random.normal(kb, (dim,), jnp.float32)
    out_nz = adapter_eraser(hidden_states, w_down, b_down, w_up_nz, b_up_nz)
    out_nz = jax.block_until_ready(out_nz)
    ref_nz = _reference(hidden_states, w_down, b_down, w_up_nz, b_up_nz)
    assert jnp.allclose(out_nz, ref_nz, atol=1e-5), "mismatch vs reference (nonzero up)"

    print("KERNEL_OK")
</pallas_src>

<mosaic_0001>
module attributes {stable_mosaic.version = 11 : i64} {
  func.func @adapter_eraser_kernel(%arg0: i32, %arg1: memref<16x128xf32, #tpu.memory_space<vmem>>, %arg2: memref<128x128xf32, #tpu.memory_space<vmem>>, %arg3: memref<1x128xf32, #tpu.memory_space<vmem>>, %arg4: memref<128x128xf32, #tpu.memory_space<vmem>>, %arg5: memref<1x128xf32, #tpu.memory_space<vmem>>, %arg6: memref<16x128xf32, #tpu.memory_space<vmem>>) attributes {dimension_semantics = [#tpu.dimension_semantics<parallel>], iteration_bounds = array<i64: 1>, scalar_prefetch = 0 : i64, scratch_operands = 0 : i64, tpu.core_type = #tpu.core_type<tc>, window_params = [{transform_indices = @transform_0, window_bounds = array<i64: 16, 128>}, {pipeline_mode = #tpu.pipeline_mode<synchronous>, transform_indices = @transform_1, window_bounds = array<i64: 128, 128>}, {pipeline_mode = #tpu.pipeline_mode<synchronous>, transform_indices = @transform_2, window_bounds = array<i64: 1, 128>}, {pipeline_mode = #tpu.pipeline_mode<synchronous>, transform_indices = @transform_3, window_bounds = array<i64: 128, 128>}, {pipeline_mode = #tpu.pipeline_mode<synchronous>, transform_indices = @transform_4, window_bounds = array<i64: 1, 128>}, {transform_indices = @transform_5, window_bounds = array<i64: 16, 128>}]} {
    %c0 = arith.constant 0 : index
    %c0_0 = arith.constant 0 : index
    %0 = vector.load %arg1[%c0, %c0_0] : memref<16x128xf32, #tpu.memory_space<vmem>>, vector<16x128xf32>
    %c0_1 = arith.constant 0 : index
    %c0_2 = arith.constant 0 : index
    %1 = vector.load %arg2[%c0_1, %c0_2] : memref<128x128xf32, #tpu.memory_space<vmem>>, vector<128x128xf32>
    %cst = arith.constant dense<0.000000e+00> : vector<16x128xf32>
    %2 = tpu.matmul %0, %1, %cst {dimension_numbers = #tpu.dot_dimension_numbers<[1], [1], [0], [0], [0, 0, 1, 0], [], []>} : vector<16x128xf32>, vector<128x128xf32>, vector<16x128xf32> -> vector<16x128xf32>
    %c0_3 = arith.constant 0 : index
    %c0_4 = arith.constant 0 : index
    %3 = vector.load %arg3[%c0_3, %c0_4] : memref<1x128xf32, #tpu.memory_space<vmem>>, vector<1x128xf32>
    %4 = vector.broadcast %3 : vector<1x128xf32> to vector<16x128xf32>
    %5 = arith.addf %2, %4 : vector<16x128xf32>
    %cst_5 = arith.constant 5.000000e-01 : f32
    %6 = vector.broadcast %cst_5 : f32 to vector<16x128xf32>
    %7 = arith.mulf %6, %5 : vector<16x128xf32>
    %cst_6 = arith.constant 0.707106769 : f32
    %8 = vector.broadcast %cst_6 : f32 to vector<16x128xf32>
    %9 = arith.mulf %5, %8 : vector<16x128xf32>
    %10 = math.erf %9 : vector<16x128xf32>
    %cst_7 = arith.constant 1.000000e+00 : f32
    %11 = vector.broadcast %cst_7 : f32 to vector<16x128xf32>
    %12 = arith.addf %11, %10 : vector<16x128xf32>
    %13 = arith.mulf %7, %12 : vector<16x128xf32>
    %c0_8 = arith.constant 0 : index
    %c0_9 = arith.constant 0 : index
    %14 = vector.load %arg4[%c0_8, %c0_9] : memref<128x128xf32, #tpu.memory_space<vmem>>, vector<128x128xf32>
    %cst_10 = arith.constant dense<0.000000e+00> : vector<16x128xf32>
    %15 = tpu.matmul %13, %14, %cst_10 {dimension_numbers = #tpu.dot_dimension_numbers<[1], [1], [0], [0], [0, 0, 1, 0], [], []>} : vector<16x128xf32>, vector<128x128xf32>, vector<16x128xf32> -> vector<16x128xf32>
    %c0_11 = arith.constant 0 : index
    %c0_12 = arith.constant 0 : index
    %16 = vector.load %arg5[%c0_11, %c0_12] : memref<1x128xf32, #tpu.memory_space<vmem>>, vector<1x128xf32>
    %17 = vector.broadcast %16 : vector<1x128xf32> to vector<16x128xf32>
    %18 = arith.addf %15, %17 : vector<16x128xf32>
    %c0_13 = arith.constant 0 : index
    %c0_14 = arith.constant 0 : index
    %19 = vector.load %arg6[%c0_13, %c0_14] : memref<16x128xf32, #tpu.memory_space<vmem>>, vector<16x128xf32>
    tpu.vector_store %arg6[%c0_13, %c0_14], %18 {strides = array<i32>} : memref<16x128xf32, #tpu.memory_space<vmem>>, vector<16x128xf32>,
    return
  }
  func.func @transform_0(%arg0: i32) -> (i32, i32) {
    %c0_i32 = arith.constant 0 : i32
    %c0_i32_0 = arith.constant 0 : i32
    return %arg0, %c0_i32 : i32, i32
  }
  func.func @transform_1(%arg0: i32) -> (i32, i32) {
    %c0_i32 = arith.constant 0 : i32
    %c0_i32_0 = arith.constant 0 : i32
    %c0_i32_1 = arith.constant 0 : i32
    return %c0_i32, %c0_i32_0 : i32, i32
  }
  func.func @transform_2(%arg0: i32) -> (i32, i32) {
    %c0_i32 = arith.constant 0 : i32
    %c0_i32_0 = arith.constant 0 : i32
    %c0_i32_1 = arith.constant 0 : i32
    return %c0_i32, %c0_i32_0 : i32, i32
  }
  func.func @transform_3(%arg0: i32) -> (i32, i32) {
    %c0_i32 = arith.constant 0 : i32
    %c0_i32_0 = arith.constant 0 : i32
    %c0_i32_1 = arith.constant 0 : i32
    return %c0_i32, %c0_i32_0 : i32, i32
  }
  func.func @transform_4(%arg0: i32) -> (i32, i32) {
    %c0_i32 = arith.constant 0 : i32
    %c0_i32_0 = arith.constant 0 : i32
    %c0_i32_1 = arith.constant 0 : i32
    return %c0_i32, %c0_i32_0 : i32, i32
  }
  func.func @transform_5(%arg0: i32) -> (i32, i32) {
    %c0_i32 = arith.constant 0 : i32
    %c0_i32_0 = arith.constant 0 : i32
    return %arg0, %c0_i32 : i32, i32
  }
}

</mosaic_0001>

<llo_original>
// kernel: tpu_custom_call.1
$region0: #{tpu_custom_call.1}
  #allocation0 [shape = 'u32[]', space=smem, size = 0x4, offset = 0x4, fixed_abs, tag = 'smem constant byte address 0x4 - core index']
  #allocation1 [shape = 'u32[144,128]{1,0:T(1,128)}', space=vmem, size = 0x12000, scoped, tag = 'internal scratch']
  %s0 = inlined_call_operand.hbm [shape: f32[16,128], index: 0, kind: input, shape index: {}]
  %s1 = inlined_call_operand.hbm [shape: f32[128,128], index: 1, kind: input, shape index: {}]
  %s2 = inlined_call_operand.hbm [shape: f32[1,128], index: 2, kind: input, shape index: {}]
  %s3 = inlined_call_operand.hbm [shape: f32[128,128], index: 3, kind: input, shape index: {}]
  %s4 = inlined_call_operand.hbm [shape: f32[1,128], index: 4, kind: input, shape index: {}]
  %s5 = inlined_call_operand.hbm [shape: f32[16,128], index: 5, kind: output, shape index: {}]
  %s6 = sld [smem:[#allocation0]]
  $region50: #{tpu_custom_call.1} parent=0
    _
  %s8 = ssub.s32 1, %s6
  %s9 = scalar_select 0, %s8, %s6
  $region1: #{tpu_custom_call.1} parent=0
    #allocation2 [shape = 'u8[8192]{0}', space=vmem, size = 0x2000, scoped, tag = 'input window, operand 0, single buffered']
    #allocation3 [shape = 's32[1]{0}', space=sflag, size = 0x4, scoped, tag = 'scoped memory for tpu_custom_call.1']
    #allocation4 [shape = 's32[1]{0}', space=sflag, size = 0x4, scoped, tag = 'scoped memory for tpu_custom_call.1']
    #allocation5 [shape = 'u8[65536]{0}', space=vmem, size = 0x10000, scoped, tag = 'input window, operand 1, single buffered']
    #allocation6 [shape = 's32[1]{0}', space=sflag, size = 0x4, scoped, tag = 'scoped memory for tpu_custom_call.1']
    #allocation7 [shape = 'u8[512]{0}', space=vmem, size = 0x400, scoped, tag = 'input window, operand 2, single buffered']
    #allocation8 [shape = 'u8[65536]{0}', space=vmem, size = 0x10000, scoped, tag = 'input window, operand 3, single buffered']
    #allocation9 [shape = 's32[1]{0}', space=sflag, size = 0x4, scoped, tag = 'scoped memory for tpu_custom_call.1']
    #allocation10 [shape = 'u8[512]{0}', space=vmem, size = 0x400, scoped, tag = 'input window, operand 4, single buffered']
    #allocation11 [shape = 'u8[8192]{0}', space=vmem, size = 0x2000, scoped, tag = 'output window, operand 0, single buffered']
    %10 = vsyncpa [#allocation3], 0
    %11 = vsyncpa [#allocation6], 0
    %12 = vsyncpa [#allocation9], 0
    %13 = vsyncpa [#allocation4], 0
    // Predicated region
    $region2: #{tpu_custom_call.1} parent=1 // pred_check
      _
    $region3: #{tpu_custom_call.1} parent=1 // pred_check_branch
      %15 = sbr.rel (0) target = $region5
    $region4: #{tpu_custom_call.1} parent=1 // pred_region
      %s17 = ssub.s32 256, 256
      %18 = vsyncadd [#allocation3], %s17
      %s19 = sshll.u32 [#allocation2], 4
      %s20 = int_to_ptr.vmem [resolvable:$true] %s19
      %25 = dma.hbm_to_vmem [thread:$0]  %s0, 256, %s20, [#allocation3], 128, 128, 8
    $region5: #{tpu_custom_call.1} parent=1 // pred_fallthru
      _
    // Predicated region
    $region6: #{tpu_custom_call.1} parent=1 // pred_check
      _
    $region7: #{tpu_custom_call.1} parent=1 // pred_check_branch
      %27 = sbr.rel (0) target = $region9
    $region8: #{tpu_custom_call.1} parent=1 // pred_region
      %s29 = ssub.s32 2048, 2048
      %30 = vsyncadd [#allocation6], %s29
      %s31 = sshll.u32 [#allocation5], 4
      %s32 = int_to_ptr.vmem [resolvable:$true] %s31
      %37 = dma.hbm_to_vmem [thread:$0]  %s1, 2048, %s32, [#allocation6], 128, 128, 8
    $region9: #{tpu_custom_call.1} parent=1 // pred_fallthru
      _
    // Predicated region
    $region10: #{tpu_custom_call.1} parent=1 // pred_check
      _
    $region11: #{tpu_custom_call.1} parent=1 // pred_check_branch
      %39 = sbr.rel (0) target = $region13
    $region12: #{tpu_custom_call.1} parent=1 // pred_region
      %s41 = ssub.s32 16, 16
      %42 = vsyncadd [#allocation6], %s41
      %s44 = sshll.u32 [#allocation7], 4
      %s45 = int_to_ptr.vmem [resolvable:$true] %s44
      %47 = dma.hbm_to_vmem [thread:$0]  %s2, 16, %s45, [#allocation6]
    $region13: #{tpu_custom_call.1} parent=1 // pred_fallthru
      _
    // Predicated region
    $region14: #{tpu_custom_call.1} parent=1 // pred_check
      _
    $region15: #{tpu_custom_call.1} parent=1 // pred_check_branch
      %49 = sbr.rel (0) target = $region17
    $region16: #{tpu_custom_call.1} parent=1 // pred_region
      %s51 = ssub.s32 2048, 2048
      %52 = vsyncadd [#allocation9], %s51
      %s53 = sshll.u32 [#allocation8], 4
      %s54 = int_to_ptr.vmem [resolvable:$true] %s53
      %59 = dma.hbm_to_vmem [thread:$0]  %s3, 2048, %s54, [#allocation9], 128, 128, 8
    $region17: #{tpu_custom_call.1} parent=1 // pred_fallthru
      _
    // Predicated region
    $region18: #{tpu_custom_call.1} parent=1 // pred_check
      _
    $region19: #{tpu_custom_call.1} parent=1 // pred_check_branch
      %61 = sbr.rel (0) target = $region21
    $region20: #{tpu_custom_call.1} parent=1 // pred_region
      %s63 = ssub.s32 16, 16
      %64 = vsyncadd [#allocation9], %s63
      %s66 = sshll.u32 [#allocation10], 4
      %s67 = int_to_ptr.vmem [resolvable:$true] %s66
      %69 = dma.hbm_to_vmem [thread:$0]  %s4, 16, %s67, [#allocation9]
    $region21: #{tpu_custom_call.1} parent=1 // pred_fallthru
      _
    // Predicated region
    $region22: #{tpu_custom_call.1} parent=1 // pred_check
      _
    $region23: #{tpu_custom_call.1} parent=1 // pred_check_branch
      %71 = sbr.rel (0) target = $region25
    $region24: #{tpu_custom_call.1} parent=1 // pred_region
      %72 = dma.done [#allocation3], 256
    $region25: #{tpu_custom_call.1} parent=1 // pred_fallthru
      _
    // Predicated region
    $region26: #{tpu_custom_call.1} parent=1 // pred_check
      _
    $region27: #{tpu_custom_call.1} parent=1 // pred_check_branch
      %74 = sbr.rel (0) target = $region29
    $region28: #{tpu_custom_call.1} parent=1 // pred_region
      %75 = dma.done [#allocation6], 2048
    $region29: #{tpu_custom_call.1} parent=1 // pred_fallthru
      _
    // Predicated region
    $region30: #{tpu_custom_call.1} parent=1 // pred_check
      _
    $region31: #{tpu_custom_call.1} parent=1 // pred_check_branch
      %77 = sbr.rel (0) target = $region33
    $region32: #{tpu_custom_call.1} parent=1 // pred_region
      %78 = dma.done [#allocation6], 16
    $region33: #{tpu_custom_call.1} parent=1 // pred_fallthru
      _
    // Predicated region
    $region34: #{tpu_custom_call.1} parent=1 // pred_check
      _
    $region35: #{tpu_custom_call.1} parent=1 // pred_check_branch
      %80 = sbr.rel (0) target = $region37
    $region36: #{tpu_custom_call.1} parent=1 // pred_region
      %81 = dma.done [#allocation9], 2048
    $region37: #{tpu_custom_call.1} parent=1 // pred_fallthru
      _
    // Predicated region
    $region38: #{tpu_custom_call.1} parent=1 // pred_check
      _
    $region39: #{tpu_custom_call.1} parent=1 // pred_check_branch
      %83 = sbr.rel (0) target = $region41
    $region40: #{tpu_custom_call.1} parent=1 // pred_region
      %84 = dma.done [#allocation9], 16
    $region41: #{tpu_custom_call.1} parent=1 // pred_fallthru
      _
    %v85 = vld [vmem:[#allocation2] sm:$0xff]
    %v86 = vld [vmem:[#allocation2 + $0x8] sm:$0xff]
    %v87 = vld [vmem:[#allocation5] sm:$0xff]
    %v88 = vld [vmem:[#allocation5 + $0x8] sm:$0xff]
    %v89 = vld [vmem:[#allocation5 + $0x10] sm:$0xff]
    %v90 = vld [vmem:[#allocation5 + $0x18] sm:$0xff]
    %v91 = vld [vmem:[#allocation5 + $0x20] sm:$0xff]
    %v92 = vld [vmem:[#allocation5 + $0x28] sm:$0xff]
    %v93 = vld [vmem:[#allocation5 + $0x30] sm:$0xff]
    %v94 = vld [vmem:[#allocation5 + $0x38] sm:$0xff]
    %v95 = vld [vmem:[#allocation5 + $0x40] sm:$0xff]
    %v96 = vld [vmem:[#allocation5 + $0x48] sm:$0xff]
    %v97 = vld [vmem:[#allocation5 + $0x50] sm:$0xff]
    %v98 = vld [vmem:[#allocation5 + $0x58] sm:$0xff]
    %v99 = vld [vmem:[#allocation5 + $0x60] sm:$0xff]
    %v100 = vld [vmem:[#allocation5 + $0x68] sm:$0xff]
    %v101 = vld [vmem:[#allocation5 + $0x70] sm:$0xff]
    %v102 = vld [vmem:[#allocation5 + $0x78] sm:$0xff]
    %v103 = vld [vmem:[#allocation7] sm:$0x1]
    %v105 = vlaneseq
    %v106 = vshrl.u32 %v105, 7
    %v107 = vsub.s32 0, %v106
    %v108 = vrot.slane %v103, %v107
    %110 = vmatprep.subr.mxu0 0.0
    %111 = vmatpush1.xpose.msra.mxu0 %v87
    %112 = vmatprep.subr.mxu0 0.0
    %113 = vmatpush1.xpose.msra.mxu0 %v88
    %114 = vmatprep.subr.mxu0 0.0
    %115 = vmatpush1.xpose.msra.mxu0 %v89
    %116 = vmatprep.subr.mxu0 0.0
    %117 = vmatpush1.xpose.msra.mxu0 %v90
    %118 = vmatprep.subr.mxu0 0.0
    %119 = vmatpush1.xpose.msra.mxu0 %v91
    %120 = vmatprep.subr.mxu0 0.0
    %121 = vmatpush1.xpose.msra.mxu0 %v92
    %122 = vmatprep.subr.mxu0 0.0
    %123 = vmatpush1.xpose.msra.mxu0 %v93
    %124 = vmatprep.subr.mxu0 0.0
    %125 = vmatpush1.xpose.msra.mxu0 %v94
    %126 = vmatprep.subr.mxu0 0.0
    %127 = vmatpush1.xpose.msra.mxu0 %v95
    %128 = vmatprep.subr.mxu0 0.0
    %129 = vmatpush1.xpose.msra.mxu0 %v96
    %130 = vmatprep.subr.mxu0 0.0
    %131 = vmatpush1.xpose.msra.mxu0 %v97
    %132 = vmatprep.subr.mxu0 0.0
    %133 = vmatpush1.xpose.msra.mxu0 %v98
    %134 = vmatprep.subr.mxu0 0.0
    %135 = vmatpush1.xpose.msra.mxu0 %v99
    %136 = vmatprep.subr.mxu0 0.0
    %137 = vmatpush1.xpose.msra.mxu0 %v100
    %138 = vmatprep.subr.mxu0 0.0
    %139 = vmatpush1.xpose.msra.mxu0 %v101
    %140 = vmatprep.subr.mxu0 0.0
    %141 = vmatpush1.xpose.msra.mxu0 %v102
    %142 = vmatprep.subr.mxu0 0.0
    %143 = vmatpush1.xpose.msra.mxu0 0.0
    %144 = vmatprep.subr.mxu0 0.0
    %145 = vmatpush1.xpose.msra.mxu0 0.0
    %146 = vmatprep.subr.mxu0 0.0
    %147 = vmatpush1.xpose.msra.mxu0 0.0
    %148 = vmatprep.subr.mxu0 0.0
    %149 = vmatpush1.xpose.msra.mxu0 0.0
    %150 = vmatprep.subr.mxu0 0.0
    %151 = vmatpush1.xpose.msra.mxu0 0.0
    %152 = vmatprep.subr.mxu0 0.0
    %153 = vmatpush1.xpose.msra.mxu0 0.0
    %154 = vmatprep.subr.mxu0 0.0
    %155 = vmatpush1.xpose.msra.mxu0 0.0
    %156 = vmatprep.subr.mxu0 0.0
    %157 = vmatpush1.xpose.msra.mxu0 0.0
    %158 = vmatprep.subr.mxu0 0.0
    %159 = vmatpush1.xpose.msra.mxu0 0.0
    %160 = vmatprep.subr.mxu0 0.0
    %161 = vmatpush1.xpose.msra.mxu0 0.0
    %162 = vmatprep.subr.mxu0 0.0
    %163 = vmatpush1.xpose.msra.mxu0 0.0
    %164 = vmatprep.subr.mxu0 0.0
    %165 = vmatpush1.xpose.msra.mxu0 0.0
    %166 = vmatprep.subr.mxu0 0.0
    %167 = vmatpush1.xpose.msra.mxu0 0.0
    %168 = vmatprep.subr.mxu0 0.0
    %169 = vmatpush1.xpose.msra.mxu0 0.0
    %170 = vmatprep.subr.mxu0 0.0
    %171 = vmatpush1.xpose.msra.mxu0 0.0
    %172 = vmatprep.subr.mxu0 0.0
    %173 = vmatpush1.xpose.msra.mxu0 0.0
    %174 = vmatprep.mubr.f32.mxu0 0.0
    %175 = vmatmul.mubr.f32.gmra.mrb[0].mxu0 %v85
    %v176 = vpop.f32.mrb[0].mxu0
    %v177 = vadd.f32 %v108, %v176
    %v178 = vpop.f32.mrb[0].mxu0
    %179 = vmatprep.mubr.f32.mxu0 0.0
    %180 = vmatmul.mubr.f32.gmra.mrb[0].mxu0 %v86
    %v181 = vpop.f32.mrb[0].mxu0
    %v182 = vadd.f32 %v108, %v181
    %v183 = vpop.f32.mrb[0].mxu0
    %184 = vdwg.mxu0
    %v185 = vmul.f32 %v177, 0.5
    %v186 = vmul.f32 %v182, 0.5
    %v187 = vmul.f32 %v177, 0.70710677
    %v188 = vmul.f32 %v182, 0.70710677
    %v189 = verf.f32.pop %v187
    %v190 = verf.f32.pop %v188
    %v191 = vadd.f32 %v189, 1.0
    %v192 = vadd.f32 %v190, 1.0
    %v193 = vmul.f32 %v185, %v191
    %v194 = vmul.f32 %v186, %v192
    %v195 = vld [vmem:[#allocation8] sm:$0xff]
    %v196 = vld [vmem:[#allocation8 + $0x8] sm:$0xff]
    %v197 = vld [vmem:[#allocation8 + $0x10] sm:$0xff]
    %v198 = vld [vmem:[#allocation8 + $0x18] sm:$0xff]
    %v199 = vld [vmem:[#allocation8 + $0x20] sm:$0xff]
    %v200 = vld [vmem:[#allocation8 + $0x28] sm:$0xff]
    %v201 = vld [vmem:[#allocation8 + $0x30] sm:$0xff]
    %v202 = vld [vmem:[#allocation8 + $0x38] sm:$0xff]
    %v203 = vld [vmem:[#allocation8 + $0x40] sm:$0xff]
    %v204 = vld [vmem:[#allocation8 + $0x48] sm:$0xff]
    %v205 = vld [vmem:[#allocation8 + $0x50] sm:$0xff]
    %v206 = vld [vmem:[#allocation8 + $0x58] sm:$0xff]
    %v207 = vld [vmem:[#allocation8 + $0x60] sm:$0xff]
    %v208 = vld [vmem:[#allocation8 + $0x68] sm:$0xff]
    %v209 = vld [vmem:[#allocation8 + $0x70] sm:$0xff]
    %v210 = vld [vmem:[#allocation8 + $0x78] sm:$0xff]
    %v211 = vld [vmem:[#allocation10] sm:$0x1]
    %v213 = vlaneseq
    %v214 = vshrl.u32 %v213, 7
    %v215 = vsub.s32 0, %v214
    %v216 = vrot.slane %v211, %v215
    %218 = vmatprep.subr.mxu0 0.0
    %219 = vmatpush1.xpose.msra.mxu0 %v195
    %220 = vmatprep.subr.mxu0 0.0
    %221 = vmatpush1.xpose.msra.mxu0 %v196
    %222 = vmatprep.subr.mxu0 0.0
    %223 = vmatpush1.xpose.msra.mxu0 %v197
    %224 = vmatprep.subr.mxu0 0.0
    %225 = vmatpush1.xpose.msra.mxu0 %v198
    %226 = vmatprep.subr.mxu0 0.0
    %227 = vmatpush1.xpose.msra.mxu0 %v199
    %228 = vmatprep.subr.mxu0 0.0
    %229 = vmatpush1.xpose.msra.mxu0 %v200
    %230 = vmatprep.subr.mxu0 0.0
    %231 = vmatpush1.xpose.msra.mxu0 %v201
    %232 = vmatprep.subr.mxu0 0.0
    %233 = vmatpush1.xpose.msra.mxu0 %v202
    %234 = vmatprep.subr.mxu0 0.0
    %235 = vmatpush1.xpose.msra.mxu0 %v203
    %236 = vmatprep.subr.mxu0 0.0
    %237 = vmatpush1.xpose.msra.mxu0 %v204
    %238 = vmatprep.subr.mxu0 0.0
    %239 = vmatpush1.xpose.msra.mxu0 %v205
    %240 = vmatprep.subr.mxu0 0.0
    %241 = vmatpush1.xpose.msra.mxu0 %v206
    %242 = vmatprep.subr.mxu0 0.0
    %243 = vmatpush1.xpose.msra.mxu0 %v207
    %244 = vmatprep.subr.mxu0 0.0
    %245 = vmatpush1.xpose.msra.mxu0 %v208
    %246 = vmatprep.subr.mxu0 0.0
    %247 = vmatpush1.xpose.msra.mxu0 %v209
    %248 = vmatprep.subr.mxu0 0.0
    %249 = vmatpush1.xpose.msra.mxu0 %v210
    %250 = vmatprep.subr.mxu0 0.0
    %251 = vmatpush1.xpose.msra.mxu0 0.0
    %252 = vmatprep.subr.mxu0 0.0
    %253 = vmatpush1.xpose.msra.mxu0 0.0
    %254 = vmatprep.subr.mxu0 0.0
    %255 = vmatpush1.xpose.msra.mxu0 0.0
    %256 = vmatprep.subr.mxu0 0.0
    %257 = vmatpush1.xpose.msra.mxu0 0.0
    %258 = vmatprep.subr.mxu0 0.0
    %259 = vmatpush1.xpose.msra.mxu0 0.0
    %260 = vmatprep.subr.mxu0 0.0
    %261 = vmatpush1.xpose.msra.mxu0 0.0
    %262 = vmatprep.subr.mxu0 0.0
    %263 = vmatpush1.xpose.msra.mxu0 0.0
    %264 = vmatprep.subr.mxu0 0.0
    %265 = vmatpush1.xpose.msra.mxu0 0.0
    %266 = vmatprep.subr.mxu0 0.0
    %267 = vmatpush1.xpose.msra.mxu0 0.0
    %268 = vmatprep.subr.mxu0 0.0
    %269 = vmatpush1.xpose.msra.mxu0 0.0
    %270 = vmatprep.subr.mxu0 0.0
    %271 = vmatpush1.xpose.msra.mxu0 0.0
    %272 = vmatprep.subr.mxu0 0.0
    %273 = vmatpush1.xpose.msra.mxu0 0.0
    %274 = vmatprep.subr.mxu0 0.0
    %275 = vmatpush1.xpose.msra.mxu0 0.0
    %276 = vmatprep.subr.mxu0 0.0
    %277 = vmatpush1.xpose.msra.mxu0 0.0
    %278 = vmatprep.subr.mxu0 0.0
    %279 = vmatpush1.xpose.msra.mxu0 0.0
    %280 = vmatprep.subr.mxu0 0.0
    %281 = vmatpush1.xpose.msra.mxu0 0.0
    %282 = vmatprep.mubr.f32.mxu0 0.0
    %283 = vmatmul.mubr.f32.gmra.mrb[0].mxu0 %v193
    %v284 = vpop.f32.mrb[0].mxu0
    %v285 = vadd.f32 %v216, %v284
    %v286 = vpop.f32.mrb[0].mxu0
    %287 = vmatprep.mubr.f32.mxu0 0.0
    %288 = vmatmul.mubr.f32.gmra.mrb[0].mxu0 %v194
    %v289 = vpop.f32.mrb[0].mxu0
    %v290 = vadd.f32 %v216, %v289
    %v291 = vpop.f32.mrb[0].mxu0
    %292 = vdwg.mxu0
    %293 = vst [vmem:[#allocation11] sm:$0xff] %v285
    %294 = vst [vmem:[#allocation11 + $0x8] sm:$0xff] %v290
    // Predicated region
    $region42: #{tpu_custom_call.1} parent=1 // pred_check
      _
    $region43: #{tpu_custom_call.1} parent=1 // pred_check_branch
      %296 = sbr.rel (0) target = $region45
    $region44: #{tpu_custom_call.1} parent=1 // pred_region
      %s298 = ssub.s32 256, 256
      %299 = vsyncadd [#allocation4], %s298
      %s300 = sshll.u32 [#allocation11], 4
      %s301 = int_to_ptr.vmem [resolvable:$true] %s300
      %306 = dma.vmem_to_hbm [thread:$0]  %s301, 256, %s5, [#allocation4], 128, 128, 8
    $region45: #{tpu_custom_call.1} parent=1 // pred_fallthru
      _
    // Predicated region
    $region46: #{tpu_custom_call.1} parent=1 // pred_check
      _
    $region47: #{tpu_custom_call.1} parent=1 // pred_check_branch
      %308 = sbr.rel (0) target = $region49
    $region48: #{tpu_custom_call.1} parent=1 // pred_region
      %309 = dma.done [#allocation4], 256
    $region49: #{tpu_custom_call.1} parent=1 // pred_fallthru
      _
    %310 = vsyncpa [#allocation3], 1
    %311 = vsyncpa [#allocation6], 1
    %312 = vsyncpa [#allocation9], 1
    %313 = vsyncpa [#allocation4], 1

</llo_original>
